<compile_context>
chip_gen: v7x
topology: tpu7x:2x2x1
jax: 0.10.0
libtpu: 0.0.40
codegen_flags: <defaults>
</compile_context>

<pallas_src>
import functools
import math

import jax
import jax.numpy as jnp
from jax.experimental import pallas as pl
from jax.experimental.pallas import tpu as pltpu

# ----------------------------- model hyper-params (small) -----------------------------
C_LAT = 4          # latent channels (sample / normal / position each have 4)
C_IN_GEN = 12      # conv_in of main unet is re-initialized to 12 channels (init_condition)
C_MODEL = 32       # model width
T_EMB = 64         # time embedding dim
HEADS = 2
HEAD_DIM = C_MODEL // HEADS
GROUPS = 8
CROSS = 32         # cross-attention (text) dim  (stands in for 1024)
L_TXT = 8          # text sequence length        (stands in for 77)
MAX_NUM_REF = 5
MAX_NUM_GEN = 12 * 3 + 4 * 2
NUM_CLASS_EMB = MAX_NUM_REF + MAX_NUM_GEN   # 49

# TODO(synk): 32 MiB is portable across v5e/v6e/v7x; at production sizes raise toward ~96 MiB on v6e
# (128 MiB VMEM) and keep <=48 MiB on v7x (64 MiB VMEM).
_VMEM_LIMIT = 32 * 1024 * 1024


def _pick_tile(dim, prefs):
    """Largest preferred tile that evenly divides `dim` (and is < dim), else the full dim."""
    for t in prefs:
        if dim > t and dim % t == 0:
            return t
    return dim


def _bf16(x):
    return x if x.dtype == jnp.bfloat16 else x.astype(jnp.bfloat16)


# ======================= Pallas kernels =======================

# ---- generic matmul: out = [res + scale*](silu?(x) @ w + b), bf16 in/out, f32 accumulate ----
def _mm_kernel(x_ref, w_ref, b_ref, *rest, act_in, scale, has_res):
    if has_res:
        r_ref, o_ref, acc_ref = rest
    else:
        o_ref, acc_ref = rest
    k = pl.program_id(2)

    @pl.when(k == 0)
    def _():
        acc_ref[...] = jnp.zeros(acc_ref.shape, jnp.float32)

    x = x_ref[...]
    if act_in:                                   # fused SiLU prologue (elementwise -> K-tiling safe)
        xf = x.astype(jnp.float32)
        x = (xf * jax.nn.sigmoid(xf)).astype(jnp.bfloat16)
    acc_ref[...] += jnp.dot(x, w_ref[...], preferred_element_type=jnp.float32)

    @pl.when(k == pl.num_programs(2) - 1)
    def _():
        r = acc_ref[...] + b_ref[...]
        if has_res:
            r = r_ref[...].astype(jnp.float32) + scale * r
        o_ref[...] = r.astype(o_ref.dtype)


def pallas_matmul(x, w, bias=None, residual=None, scale=1.0, act_in=False,
                  out_dtype=jnp.bfloat16):
    """x: (M, K), w: (K, N) bf16 -> (M, N).  If residual: out = residual + scale*(x@w+b)."""
    M, K = x.shape
    N = w.shape[1]
    if bias is None:
        bias = jnp.zeros((1, N), jnp.float32)
    tm = _pick_tile(M, (512, 256, 128))
    tn = _pick_tile(N, (512, 256))
    tk = _pick_tile(K, (512, 256))
    grid = (M // tm, N // tn, K // tk)

    in_specs = [pl.BlockSpec((tm, tk), lambda i, j, k: (i, k)),
                pl.BlockSpec((tk, tn), lambda i, j, k: (k, j)),
                pl.BlockSpec((1, tn), lambda i, j, k: (0, j))]
    args = [_bf16(x), w, bias]
    has_res = residual is not None
    if has_res:
        in_specs.append(pl.BlockSpec((tm, tn), lambda i, j, k: (i, j)))
        args.append(_bf16(residual))

    kern = functools.partial(_mm_kernel, act_in=act_in, scale=float(scale), has_res=has_res)
    return pl.pallas_call(
        kern,
        out_shape=jax.ShapeDtypeStruct((M, N), out_dtype),
        grid=grid,
        in_specs=in_specs,
        out_specs=pl.BlockSpec((tm, tn), lambda i, j, k: (i, j)),
        scratch_shapes=[pltpu.VMEM((tm, tn), jnp.float32)],
        compiler_params=pltpu.CompilerParams(
            dimension_semantics=("parallel", "parallel", "arbitrary"),
            vmem_limit_bytes=_VMEM_LIMIT),
    )(*args)


# ---- fused LayerNorm + matmul (optionally + GEGLU epilogue), bf16 in/out ----
def _ln_mm_kernel(x_ref, g_ref, b_ref, w_ref, wb_ref, o_ref, *, eps, geglu):
    x = x_ref[...].astype(jnp.float32)
    mean = jnp.mean(x, axis=-1, keepdims=True)
    var = jnp.mean(jnp.square(x - mean), axis=-1, keepdims=True)
    y = (x - mean) * jax.lax.rsqrt(var + eps) * g_ref[...] + b_ref[...]
    h = jnp.dot(y.astype(jnp.bfloat16), w_ref[...],
                preferred_element_type=jnp.float32) + wb_ref[...]
    if geglu:
        d = h.shape[-1] // 2
        # TODO(synk): diffusers GEGLU uses exact (erf) gelu; tanh approximation used in-kernel.
        h = h[:, :d] * jax.nn.gelu(h[:, d:], approximate=True)
    o_ref[...] = h.astype(o_ref.dtype)


def pallas_ln_mm(x, gamma, beta, w, bias=None, geglu=False, eps=1e-5):
    R, C = x.shape
    N = w.shape[1]
    if bias is None:
        bias = jnp.zeros((1, N), jnp.float32)
    Nout = N // 2 if geglu else N
    tr = _pick_tile(R, (512, 256))
    # TODO(synk): at production widths add an N-tiling grid axis so the (C, N) weight block fits
    # v7x's 64 MiB VMEM.
    return pl.pallas_call(
        functools.partial(_ln_mm_kernel, eps=eps, geglu=geglu),
        out_shape=jax.ShapeDtypeStruct((R, Nout), jnp.bfloat16),
        grid=(R // tr,),
        in_specs=[pl.BlockSpec((tr, C), lambda i: (i, 0)),
                  pl.BlockSpec((1, C), lambda i: (0, 0)),
                  pl.BlockSpec((1, C), lambda i: (0, 0)),
                  pl.BlockSpec((C, N), lambda i: (0, 0)),
                  pl.BlockSpec((1, N), lambda i: (0, 0))],
        out_specs=pl.BlockSpec((tr, Nout), lambda i: (i, 0)),
        compiler_params=pltpu.CompilerParams(dimension_semantics=("parallel",),
                                             vmem_limit_bytes=_VMEM_LIMIT),
    )(_bf16(x), gamma, beta, w, bias)


# ---- fused LayerNorm + concatenated QKV projection; also returns the normed activations ----
def _ln_qkv_kernel(x_ref, g_ref, b_ref, w_ref, n_ref, o_ref, *, eps):
    x = x_ref[...].astype(jnp.float32)
    mean = jnp.mean(x, axis=-1, keepdims=True)
    var = jnp.mean(jnp.square(x - mean), axis=-1, keepdims=True)
    y = (x - mean) * jax.lax.rsqrt(var + eps) * g_ref[...] + b_ref[...]
    n_ref[...] = y.astype(n_ref.dtype)
    o_ref[...] = jnp.dot(y.astype(jnp.bfloat16), w_ref[...],
                         preferred_element_type=jnp.float32).astype(o_ref.dtype)


def pallas_ln_qkv(x, gamma, beta, w, eps=1e-5):
    R, C = x.shape
    N = w.shape[1]
    tr = _pick_tile(R, (512, 256))
    return pl.pallas_call(
        functools.partial(_ln_qkv_kernel, eps=eps),
        out_shape=(jax.ShapeDtypeStruct((R, C), jnp.bfloat16),
                   jax.ShapeDtypeStruct((R, N), jnp.bfloat16)),
        grid=(R // tr,),
        in_specs=[pl.BlockSpec((tr, C), lambda i: (i, 0)),
                  pl.BlockSpec((1, C), lambda i: (0, 0)),
                  pl.BlockSpec((1, C), lambda i: (0, 0)),
                  pl.BlockSpec((C, N), lambda i: (0, 0))],
        out_specs=[pl.BlockSpec((tr, C), lambda i: (i, 0)),
                   pl.BlockSpec((tr, N), lambda i: (i, 0))],
        compiler_params=pltpu.CompilerParams(dimension_semantics=("parallel",),
                                             vmem_limit_bytes=_VMEM_LIMIT),
    )(_bf16(x), gamma, beta, w)


# ---- fused GroupNorm (+affine, + optional SiLU), NHWC, group stats via (C, C) group-mix matmul ----
def _gn_kernel(x_ref, g_ref, b_ref, mix_ref, o_ref, *, eps, act):
    x = x_ref[...].astype(jnp.float32)                                   # (N, HW, C)
    mean_c = jnp.mean(x, axis=1)                                         # (N, C) per-channel
    mu = jnp.dot(mean_c, mix_ref[...], preferred_element_type=jnp.float32)   # group mean per channel
    d = x - mu[:, None, :]
    var_c = jnp.mean(d * d, axis=1)
    var = jnp.dot(var_c, mix_ref[...], preferred_element_type=jnp.float32)
    y = d * jax.lax.rsqrt(var + eps)[:, None, :] * g_ref[...] + b_ref[...]
    if act:
        y = y * jax.nn.sigmoid(y)                                        # SiLU
    o_ref[...] = y.astype(o_ref.dtype)


def groupnorm_nhwc(x, gamma, beta, gn_mix, eps, act):
    """x: (N, H, W, C) bf16 -> group-normed (+affine, +optional SiLU), NHWC bf16."""
    N, H, W, C = x.shape
    HW = H * W
    xg = _bf16(x).reshape(N, HW, C)
    out = pl.pallas_call(
        functools.partial(_gn_kernel, eps=eps, act=act),
        out_shape=jax.ShapeDtypeStruct((N, HW, C), jnp.bfloat16),
        grid=(1,),
        in_specs=[pl.BlockSpec((N, HW, C), lambda i: (0, 0, 0)),
                  pl.BlockSpec((1, C), lambda i: (0, 0)),
                  pl.BlockSpec((1, C), lambda i: (0, 0)),
                  pl.BlockSpec((C, C), lambda i: (0, 0))],
        out_specs=pl.BlockSpec((N, HW, C), lambda i: (0, 0, 0)),
        compiler_params=pltpu.CompilerParams(dimension_semantics=("arbitrary",),
                                             vmem_limit_bytes=_VMEM_LIMIT),
    )(xg, gamma, beta, gn_mix)
    return out.reshape(N, H, W, C)


# ---- 3x3 conv, padding=1, NHWC: in-VMEM im2col (lane concat of the 9 taps) + one deep matmul ----
def _conv3x3_kernel(x_ref, w_ref, b_ref, *rest, H, W, has_pb, has_res):
    idx = 0
    pb_ref = None
    r_ref = None
    if has_pb:
        pb_ref = rest[idx]; idx += 1
    if has_res:
        r_ref = rest[idx]; idx += 1
    o_ref = rest[idx]

    Wp = W + 2
    HWp = H * Wp
    taps = []
    for dy in range(3):
        for dx in range(3):
            off = dy * Wp + dx
            taps.append(x_ref[0, off:off + HWp, :])                 # (H*Wp, Cin) bf16
    col = jnp.concatenate(taps, axis=-1)                            # (H*Wp, 9*Cin) bf16, in VMEM
    res = jnp.dot(col, w_ref[...], preferred_element_type=jnp.float32) + b_ref[...]
    if has_pb:                                                      # per-sample time-embedding bias
        res = res + pb_ref[0]
    # drop the 2 junk pad columns per row in-kernel (no junk-column HBM writes)
    rows = [res[y * Wp: y * Wp + W, :] for y in range(H)]
    out = jnp.concatenate(rows, axis=0)                             # (H*W, Cout) f32
    if has_res:
        out = out + r_ref[0].astype(jnp.float32)
    o_ref[0] = out.astype(o_ref.dtype)


def conv2d_3x3(x, wt, b, sample_bias=None, residual=None):
    """x: (N, H, W, Cin) bf16 NHWC; wt: (9*Cin, Cout) bf16; padding=1, stride=1 -> (N, H, W, Cout) bf16.
    Optional: sample_bias (N, Cout) added per sample; residual (N, H, W, Cout) fused into the epilogue."""
    N, H, W, Cin = x.shape
    Cout = wt.shape[1]
    Wp = W + 2
    xp = jnp.pad(_bf16(x), ((0, 0), (1, 3), (1, 1), (0, 0)))        # extra bottom pad keeps taps in-bounds
    xp = xp.reshape(N, (H + 4) * Wp, Cin)

    in_specs = [pl.BlockSpec((1, (H + 4) * Wp, Cin), lambda n: (n, 0, 0)),
                pl.BlockSpec((9 * Cin, Cout), lambda n: (0, 0)),
                pl.BlockSpec((1, Cout), lambda n: (0, 0))]
    args = [xp, wt, b]
    has_pb = sample_bias is not None
    has_res = residual is not None
    if has_pb:
        args.append(sample_bias.astype(jnp.float32).reshape(N, 1, Cout))
        in_specs.append(pl.BlockSpec((1, 1, Cout), lambda n: (n, 0, 0)))
    if has_res:
        args.append(_bf16(residual).reshape(N, H * W, Cout))
        in_specs.append(pl.BlockSpec((1, H * W, Cout), lambda n: (n, 0, 0)))

    out = pl.pallas_call(
        functools.partial(_conv3x3_kernel, H=H, W=W, has_pb=has_pb, has_res=has_res),
        out_shape=jax.ShapeDtypeStruct((N, H * W, Cout), jnp.bfloat16),
        grid=(N,),
        in_specs=in_specs,
        out_specs=pl.BlockSpec((1, H * W, Cout), lambda n: (n, 0, 0)),
        compiler_params=pltpu.CompilerParams(dimension_semantics=("parallel",),
                                             vmem_limit_bytes=_VMEM_LIMIT),
    )(*args)
    return out.reshape(N, H, W, Cout)


# ---- flash attention with fused out-projection + residual + scale ----
def _attn_kernel(q_ref, k_ref, v_ref, wo_ref, bo_ref, r_ref, o_ref,
                 m_ref, l_ref, acc_ref, *, heads, dh, sm_scale, out_scale):
    j = pl.program_id(1)

    @pl.when(j == 0)
    def _():
        m_ref[...] = jnp.full(m_ref.shape, -1e30, jnp.float32)
        l_ref[...] = jnp.zeros(l_ref.shape, jnp.float32)
        acc_ref[...] = jnp.zeros(acc_ref.shape, jnp.float32)

    # TODO(synk): at production head counts fold heads into the grid / fori_loop; heads=2 here so the
    # static loop keeps only two small score tiles live.
    for h in range(heads):
        q = q_ref[0, :, h * dh:(h + 1) * dh]                       # (Lq, dh) bf16
        k = k_ref[0, :, h * dh:(h + 1) * dh]                       # (tk, dh) bf16
        v = v_ref[0, :, h * dh:(h + 1) * dh]
        s = jax.lax.dot_general(q, k, (((1,), (1,)), ((), ())),
                                preferred_element_type=jnp.float32) * sm_scale   # (Lq, tk)
        m_prev = m_ref[h]
        m_new = jnp.maximum(m_prev, jnp.max(s, axis=-1, keepdims=True))
        alpha = jnp.exp(m_prev - m_new)
        p = jnp.exp(s - m_new)
        l_ref[h] = alpha * l_ref[h] + jnp.sum(p, axis=-1, keepdims=True)
        acc_ref[h] = alpha * acc_ref[h] + jnp.dot(p.astype(jnp.bfloat16), v,
                                                  preferred_element_type=jnp.float32)
        m_ref[h] = m_new

    @pl.when(j == pl.num_programs(1) - 1)
    def _():
        out = jnp.zeros(o_ref.shape[1:], jnp.float32)              # (Lq, C)
        for h in range(heads):
            inv = pl.reciprocal(l_ref[h], approx=True)             # (Lq, 1)
            ph = (acc_ref[h] * inv).astype(jnp.bfloat16)           # (Lq, dh)
            out = out + jnp.dot(ph, wo_ref[h * dh:(h + 1) * dh, :],
                                preferred_element_type=jnp.float32)
        out = r_ref[0].astype(jnp.float32) + out_scale * (out + bo_ref[...])
        o_ref[0] = out.astype(o_ref.dtype)


def pallas_attn_out(q, k, v, wo, bo, residual, out_scale, heads, kv_group=1):
    """q: (B, Lq, C), k/v: (Bkv, Lk, C) with Bkv = B // kv_group.
    Returns residual + out_scale * (attention(q,k,v) @ wo + bo)  as (B, Lq, C) bf16."""
    B, Lq, C = q.shape
    Lk = k.shape[1]
    dh = C // heads
    sm_scale = 1.0 / math.sqrt(dh)
    tk = 256 if (Lk > 256 and Lk % 256 == 0) else Lk
    nk = Lk // tk
    kv_map = lambda b, j: (b // kv_group, j, 0)

    return pl.pallas_call(
        functools.partial(_attn_kernel, heads=heads, dh=dh,
                          sm_scale=sm_scale, out_scale=float(out_scale)),
        out_shape=jax.ShapeDtypeStruct((B, Lq, C), jnp.bfloat16),
        grid=(B, nk),
        in_specs=[pl.BlockSpec((1, Lq, C), lambda b, j: (b, 0, 0)),
                  pl.BlockSpec((1, tk, C), kv_map),
                  pl.BlockSpec((1, tk, C), kv_map),
                  pl.BlockSpec((C, C), lambda b, j: (0, 0)),
                  pl.BlockSpec((1, C), lambda b, j: (0, 0)),
                  pl.BlockSpec((1, Lq, C), lambda b, j: (b, 0, 0))],
        out_specs=pl.BlockSpec((1, Lq, C), lambda b, j: (b, 0, 0)),
        scratch_shapes=[pltpu.VMEM((heads, Lq, 1), jnp.float32),
                        pltpu.VMEM((heads, Lq, 1), jnp.float32),
                        pltpu.VMEM((heads, Lq, dh), jnp.float32)],
        compiler_params=pltpu.CompilerParams(
            dimension_semantics=("parallel", "arbitrary"),
            vmem_limit_bytes=_VMEM_LIMIT),
    )(_bf16(q), _bf16(k), _bf16(v), wo, bo, _bf16(residual))


# ---- fused time-embedding MLP: silu(x@w1+b1)@w2+b2 ----
def _mlp_kernel(x_ref, w1_ref, b1_ref, w2_ref, b2_ref, o_ref):
    h = jnp.dot(x_ref[...], w1_ref[...], preferred_element_type=jnp.float32) + b1_ref[...]
    h = h * jax.nn.sigmoid(h)
    o_ref[...] = (jnp.dot(h.astype(jnp.bfloat16), w2_ref[...],
                          preferred_element_type=jnp.float32) + b2_ref[...]).astype(o_ref.dtype)


def pallas_time_mlp(x, w1, b1, w2, b2):
    M, K = x.shape
    H1 = w1.shape[1]
    H2 = w2.shape[1]
    return pl.pallas_call(
        _mlp_kernel,
        out_shape=jax.ShapeDtypeStruct((M, H2), jnp.float32),
        grid=(1,),
        in_specs=[pl.BlockSpec((M, K), lambda i: (0, 0)),
                  pl.BlockSpec((K, H1), lambda i: (0, 0)),
                  pl.BlockSpec((1, H1), lambda i: (0, 0)),
                  pl.BlockSpec((H1, H2), lambda i: (0, 0)),
                  pl.BlockSpec((1, H2), lambda i: (0, 0))],
        out_specs=pl.BlockSpec((M, H2), lambda i: (0, 0)),
        compiler_params=pltpu.CompilerParams(dimension_semantics=("arbitrary",),
                                             vmem_limit_bytes=_VMEM_LIMIT),
    )(_bf16(x), w1, b1, w2, b2)


# ----------------------------- Basic2p5DTransformerBlock -----------------------------
def basic_2p5d_transformer_block(p, hidden_states, encoder_hidden_states, *,
                                 mode, num_in_batch, condition_embed_dict, layer_name,
                                 mva_scale, ref_scale, use_ma, use_ra):
    BN, L, C = hidden_states.shape
    B = BN // num_in_batch
    hid2d = hidden_states.reshape(BN * L, C)

    # --- norm1 fused with ALL projections that consume it: self QKV (+ rv Q) (+ mv QKV) ---
    if 'w' in mode:
        norm2d, qkv = pallas_ln_qkv(hid2d, p['ln1_g'], p['ln1_b'], p['qkv_w'])
    else:
        norm2d = None
        qkv = pallas_ln_mm(hid2d, p['ln1_g'], p['ln1_b'], p['qkv_w'])
    n_chunks = qkv.shape[1] // C
    chunks = jnp.split(qkv, n_chunks, axis=-1)
    q1, k1, v1 = chunks[0], chunks[1], chunks[2]
    ci = 3
    q_rv = None
    if use_ra:
        q_rv = chunks[ci]
        ci += 1
    if use_ma:
        q_mv, k_mv, v_mv = chunks[ci], chunks[ci + 1], chunks[ci + 2]

    # --- attn1 (self-attention), out-proj + residual fused in-kernel ---
    hid = pallas_attn_out(q1.reshape(BN, L, C), k1.reshape(BN, L, C), v1.reshape(BN, L, C),
                          p['attn1_wo'], p['attn1_bo'],
                          residual=hidden_states, out_scale=1.0, heads=HEADS)

    # write-mode: cache the normed hidden states, merged over views
    if 'w' in mode:
        condition_embed_dict[layer_name] = norm2d.reshape(B, num_in_batch * L, C)

    # read-mode: reference attention (K/V projected once per batch element; views share via index_map)
    if 'r' in mode and use_ra:
        cond = condition_embed_dict[layer_name]                 # (B, Lr, C) bf16
        Lr = cond.shape[1]
        kv_rv = pallas_matmul(cond.reshape(-1, C), p['rv_kv_w'])
        k_rv, v_rv = jnp.split(kv_rv, 2, axis=-1)
        hid = pallas_attn_out(q_rv.reshape(BN, L, C),
                              k_rv.reshape(B, Lr, C), v_rv.reshape(B, Lr, C),
                              p['rv_wo'], p['rv_bo'], residual=hid,
                              out_scale=ref_scale, heads=HEADS, kv_group=num_in_batch)

    # multiview attention (over all views of one batch element)
    if num_in_batch > 1 and use_ma:
        Lm = num_in_batch * L
        hid_mv = pallas_attn_out(q_mv.reshape(B, Lm, C), k_mv.reshape(B, Lm, C),
                                 v_mv.reshape(B, Lm, C), p['mv_wo'], p['mv_bo'],
                                 residual=hid.reshape(B, Lm, C),
                                 out_scale=mva_scale, heads=HEADS)
        hid = hid_mv.reshape(BN, L, C)

    # --- attn2 (cross-attention to text): norm2 fused with the Q projection ---
    q2 = pallas_ln_mm(hid.reshape(-1, C), p['ln2_g'], p['ln2_b'], p['attn2_q_w'])
    Ltxt, Cc = encoder_hidden_states.shape[1], encoder_hidden_states.shape[2]
    kv2 = pallas_matmul(encoder_hidden_states.reshape(-1, Cc), p['attn2_kv_w'])
    k2, v2 = jnp.split(kv2, 2, axis=-1)
    hid = pallas_attn_out(q2.reshape(BN, L, C), k2.reshape(BN, Ltxt, C), v2.reshape(BN, Ltxt, C),
                          p['attn2_wo'], p['attn2_bo'], residual=hid,
                          out_scale=1.0, heads=HEADS)

    # --- feed-forward: fused norm3 + ff_w1 + GEGLU, then ff_w2 with fused residual ---
    h = pallas_ln_mm(hid.reshape(-1, C), p['ln3_g'], p['ln3_b'], p['ff_w1'],
                     bias=p['ff_b1'], geglu=True)
    hid2d = pallas_matmul(h, p['ff_w2'], bias=p['ff_b2'], residual=hid.reshape(-1, C))
    return hid2d.reshape(BN, L, C)


# ----------------------------- miniature UNet forward (NHWC internally) -----------------------------
def unet_forward(p, sample, timestep, encoder_hidden_states, class_labels, class_emb_table,
                 *, mode, num_in_batch, condition_embed_dict, layer_name,
                 mva_scale, ref_scale, use_ma, use_ra):
    BN = sample.shape[0]

    # --- time + camera(class) embedding ---
    t = jnp.full((BN,), timestep, jnp.float32)
    half = C_MODEL // 2
    freqs = jnp.exp(-jnp.log(10000.0) * jnp.arange(half, dtype=jnp.float32) / half)
    args = t[:, None] * freqs[None, :]
    temb = jnp.concatenate([jnp.cos(args), jnp.sin(args)], axis=-1)   # flip_sin_to_cos
    emb = pallas_time_mlp(temb, p['te1_w'], p['te1_b'], p['te2_w'], p['te2_b'])
    if class_emb_table is not None and class_labels is not None:
        emb = emb + class_emb_table[class_labels]

    # NCHW -> NHWC once per UNet pass, activations bf16 from here on
    x = jnp.transpose(sample, (0, 2, 3, 1)).astype(jnp.bfloat16)

    # --- conv_in ---
    x = conv2d_3x3(x, p['conv_in_w'], p['conv_in_b'])

    # --- ResnetBlock2D (timestep injection fused into conv1 epilogue, residual into conv2) ---
    h = groupnorm_nhwc(x, p['rn1_g'], p['rn1_b'], p['gn_mix'], 1e-5, act=True)
    tp = pallas_matmul(emb, p['rtemb_w'], bias=p['rtemb_b'], act_in=True,
                       out_dtype=jnp.float32)                        # silu(emb) @ W + b  (BN, C)
    h = conv2d_3x3(h, p['rconv1_w'], p['rconv1_b'], sample_bias=tp)
    h = groupnorm_nhwc(h, p['rn2_g'], p['rn2_b'], p['gn_mix'], 1e-5, act=True)
    x = conv2d_3x3(h, p['rconv2_w'], p['rconv2_b'], residual=x)

    # --- Transformer2DModel wrapping one Basic2p5DTransformerBlock ---
    residual_t = x
    h = groupnorm_nhwc(x, p['tnorm_g'], p['tnorm_b'], p['gn_mix'], 1e-6, act=False)
    BN_, H, W, C = h.shape
    h2d = pallas_matmul(h.reshape(-1, C), p['proj_in_w'], bias=p['proj_in_b'])
    h3d = basic_2p5d_transformer_block(
        p, h2d.reshape(BN_, H * W, C), encoder_hidden_states, mode=mode,
        num_in_batch=num_in_batch, condition_embed_dict=condition_embed_dict,
        layer_name=layer_name, mva_scale=mva_scale, ref_scale=ref_scale,
        use_ma=use_ma, use_ra=use_ra)
    h2d = pallas_matmul(h3d.reshape(-1, C), p['proj_out_w'], bias=p['proj_out_b'],
                        residual=residual_t.reshape(-1, C))
    x = h2d.reshape(BN_, H, W, C)

    # --- conv_norm_out / conv_out ---
    x = groupnorm_nhwc(x, p['out_norm_g'], p['out_norm_b'], p['gn_mix'], 1e-5, act=True)
    x = conv2d_3x3(x, p['conv_out_w'], p['conv_out_b'])
    return jnp.transpose(x, (0, 3, 1, 2))                            # back to NCHW


# ----------------------------- UNet2p5DConditionModel forward -----------------------------
def unet2p5d_forward(params, sample, timestep, encoder_hidden_states, cached_condition):
    B, N_gen, _, H, W = sample.shape
    assert H == W

    # camera embedding indices for generated views (+ offset by max_num_ref_image)
    camera_info_gen = (cached_condition['camera_info_gen'] + MAX_NUM_REF).reshape(-1)

    # channel-concat latent / normal / position -> 12 channels, flatten views
    parts = [sample]
    if 'normal_imgs' in cached_condition:
        parts.append(cached_condition['normal_imgs'])
    if 'position_imgs' in cached_condition:
        parts.append(cached_condition['position_imgs'])
    sample_cat = jnp.concatenate(parts, axis=2)
    sample_cat = sample_cat.reshape(B * N_gen, sample_cat.shape[2], H, W)

    # repeat text embedding per generated view
    ehs_gen = jnp.broadcast_to(encoder_hidden_states[:, None],
                               (B, N_gen) + encoder_hidden_states.shape[1:])
    ehs_gen = ehs_gen.reshape(B * N_gen, *encoder_hidden_states.shape[1:]).astype(jnp.bfloat16)

    # ---- reference pass (dual-stream unet, mode='w') populates condition_embed_dict ----
    condition_embed_dict = {}
    ref_latents = cached_condition['ref_latents']            # (B, N_ref, 4, H, W)
    N_ref = ref_latents.shape[1]
    ref_latents_flat = ref_latents.reshape(B * N_ref, C_LAT, H, W)
    ehs_ref = jnp.broadcast_to(params['learned_text_clip_ref'][None],
                               (B, N_ref, L_TXT, CROSS)).reshape(B * N_ref, L_TXT, CROSS)
    ehs_ref = ehs_ref.astype(jnp.bfloat16)
    # unet_dual is deep-copied *before* init_camera_embedding, so it has no class embedding.
    _ = unet_forward(params['unet_ref'], ref_latents_flat, 0.0, ehs_ref,
                     None, None, mode='w', num_in_batch=N_ref,
                     condition_embed_dict=condition_embed_dict, layer_name='mid_0_0',
                     mva_scale=1.0, ref_scale=1.0, use_ma=False, use_ra=False)

    mva_scale = cached_condition.get('mva_scale', 1.0)
    ref_scale = cached_condition.get('ref_scale', 1.0)

    # ---- generation pass (mode='r') with reference + multiview attention ----
    out = unet_forward(params['unet_gen'], sample_cat, timestep, ehs_gen,
                       camera_info_gen, params['class_emb'], mode='r',
                       num_in_batch=N_gen, condition_embed_dict=condition_embed_dict,
                       layer_name='mid_0_0', mva_scale=mva_scale, ref_scale=ref_scale,
                       use_ma=True, use_ra=True)
    return out.astype(jnp.float32)


# ----------------------------- deterministic parameter init -----------------------------
class ParamGen:
    def __init__(self, key):
        self.key = key

    def normal(self, shape, scale=0.05):
        self.key, sub = jax.random.split(self.key)
        return jax.random.normal(sub, shape, jnp.float32) * scale


def _zeros_bias(n):
    return jnp.zeros((1, n), jnp.float32)


def _conv_weight(pg, cout, cin):
    """PyTorch (Cout, Cin, 3, 3) -> MXU-ready (9*Cin, Cout) bf16, pre-converted at param build time."""
    w = pg.normal((cout, cin, 3, 3))
    return jnp.transpose(w, (2, 3, 1, 0)).reshape(9 * cin, cout).astype(jnp.bfloat16)


def make_unet_params(pg, in_ch, use_ma, use_ra):
    C, T = C_MODEL, T_EMB

    def attn(q_dim, kv_dim):
        return {'wq': pg.normal((q_dim, C)), 'wk': pg.normal((kv_dim, C)),
                'wv': pg.normal((kv_dim, C)),
                'wo': pg.normal((C, C)).astype(jnp.bfloat16), 'bo': _zeros_bias(C)}

    a1 = attn(C, C)
    a2 = attn(C, CROSS)
    rv = attn(C, C) if use_ra else None
    mv = attn(C, C) if use_ma else None

    # norm1 consumers concatenated once: [q1|k1|v1] (+q_rv) (+q_mv|k_mv|v_mv)
    qkv_cols = [a1['wq'], a1['wk'], a1['wv']]
    if use_ra:
        qkv_cols.append(rv['wq'])
    if use_ma:
        qkv_cols += [mv['wq'], mv['wk'], mv['wv']]
    qkv_w = jnp.concatenate(qkv_cols, axis=1).astype(jnp.bfloat16)

    cg = C // GROUPS
    gidx = jnp.arange(C) // cg
    gn_mix = (gidx[:, None] == gidx[None, :]).astype(jnp.float32) / cg     # (C, C) group-average

    p = {
        'conv_in_w': _conv_weight(pg, C, in_ch), 'conv_in_b': _zeros_bias(C),
        'te1_w': pg.normal((C, T)).astype(jnp.bfloat16), 'te1_b': _zeros_bias(T),
        'te2_w': pg.normal((T, T)).astype(jnp.bfloat16), 'te2_b': _zeros_bias(T),
        'rn1_g': jnp.ones((1, C), jnp.float32), 'rn1_b': jnp.zeros((1, C), jnp.float32),
        'rconv1_w': _conv_weight(pg, C, C), 'rconv1_b': _zeros_bias(C),
        'rtemb_w': pg.normal((T, C)).astype(jnp.bfloat16), 'rtemb_b': _zeros_bias(C),
        'rn2_g': jnp.ones((1, C), jnp.float32), 'rn2_b': jnp.zeros((1, C), jnp.float32),
        'rconv2_w': _conv_weight(pg, C, C), 'rconv2_b': _zeros_bias(C),
        'tnorm_g': jnp.ones((1, C), jnp.float32), 'tnorm_b': jnp.zeros((1, C), jnp.float32),
        'proj_in_w': pg.normal((C, C)).astype(jnp.bfloat16), 'proj_in_b': _zeros_bias(C),
        'proj_out_w': pg.normal((C, C)).astype(jnp.bfloat16), 'proj_out_b': _zeros_bias(C),
        'ln1_g': jnp.ones((1, C), jnp.float32), 'ln1_b': jnp.zeros((1, C), jnp.float32),
        'qkv_w': qkv_w,
        'attn1_wo': a1['wo'], 'attn1_bo': a1['bo'],
        'ln2_g': jnp.ones((1, C), jnp.float32), 'ln2_b': jnp.zeros((1, C), jnp.float32),
        'attn2_q_w': a2['wq'].astype(jnp.bfloat16),
        'attn2_kv_w': jnp.concatenate([a2['wk'], a2['wv']], axis=1).astype(jnp.bfloat16),
        'attn2_wo': a2['wo'], 'attn2_bo': a2['bo'],
        'ln3_g': jnp.ones((1, C), jnp.float32), 'ln3_b': jnp.zeros((1, C), jnp.float32),
        'ff_w1': pg.normal((C, 8 * C)).astype(jnp.bfloat16), 'ff_b1': _zeros_bias(8 * C),
        'ff_w2': pg.normal((4 * C, C)).astype(jnp.bfloat16), 'ff_b2': _zeros_bias(C),
        'out_norm_g': jnp.ones((1, C), jnp.float32), 'out_norm_b': jnp.zeros((1, C), jnp.float32),
        'conv_out_w': _conv_weight(pg, C_LAT, C), 'conv_out_b': _zeros_bias(C_LAT),
        'gn_mix': gn_mix,
    }
    if use_ra:
        p['rv_kv_w'] = jnp.concatenate([rv['wk'], rv['wv']], axis=1).astype(jnp.bfloat16)
        p['rv_wo'] = rv['wo']
        p['rv_bo'] = rv['bo']
    if use_ma:
        p['mv_wo'] = mv['wo']
        p['mv_bo'] = mv['bo']
    return p


def make_params(key):
    pg = ParamGen(key)
    return {
        'unet_gen': make_unet_params(pg, C_IN_GEN, use_ma=True, use_ra=True),
        'unet_ref': make_unet_params(pg, C_LAT, use_ma=False, use_ra=False),
        'class_emb': pg.normal((NUM_CLASS_EMB, T_EMB)),
        'learned_text_clip_gen': pg.normal((1, L_TXT, CROSS), 1.0),  # unused in forward (parity)
        'learned_text_clip_ref': pg.normal((1, L_TXT, CROSS), 1.0),
    }


# ----------------------------- main -----------------------------
if __name__ == "__main__":
    key = jax.random.PRNGKey(0)
    params = make_params(key)

    B, N_gen, N_ref, H, W = 1, 2, 2, 16, 16
    ks = jax.random.split(jax.random.PRNGKey(0), 8)
    sample = jax.random.normal(ks[1], (B, N_gen, C_LAT, H, W), jnp.float32)
    encoder_hidden_states = jax.random.normal(ks[2], (B, L_TXT, CROSS), jnp.float32)
    cached_condition = {
        'normal_imgs': jax.random.normal(ks[3], (B, N_gen, C_LAT, H, W), jnp.float32),
        'position_imgs': jax.random.normal(ks[4], (B, N_gen, C_LAT, H, W), jnp.float32),
        'ref_latents': jax.random.normal(ks[5], (B, N_ref, C_LAT, H, W), jnp.float32),
        'camera_info_gen': jnp.array([[0, 1]], jnp.int32),
        'camera_info_ref': jnp.array([[0, 1]], jnp.int32),
        'mva_scale': 0.9,
        'ref_scale': 0.8,
    }
    timestep = 10.0

    out = unet2p5d_forward(params, sample, timestep, encoder_hidden_states, cached_condition)
    out = jax.block_until_ready(out)
    assert out.shape == (B * N_gen, C_LAT, H, W), out.shape
    assert bool(jnp.all(jnp.isfinite(out)))
    # TODO(synk): the real model wraps the full diffusers UNet2DConditionModel (many down/mid/up
    # blocks); this script reproduces the 2.5D forward logic on a miniature UNet.
    print("KERNEL_OK")
</pallas_src>

<mosaic_0001>
module attributes {stable_mosaic.version = 11 : i64} {
  func.func @_mlp_kernel(%arg0: i32, %arg1: memref<2x32xbf16, #tpu.memory_space<vmem>>, %arg2: memref<32x64xbf16, #tpu.memory_space<vmem>>, %arg3: memref<1x64xf32, #tpu.memory_space<vmem>>, %arg4: memref<64x64xbf16, #tpu.memory_space<vmem>>, %arg5: memref<1x64xf32, #tpu.memory_space<vmem>>, %arg6: memref<2x64xf32, #tpu.memory_space<vmem>>) attributes {dimension_semantics = [#tpu.dimension_semantics<arbitrary>], iteration_bounds = array<i64: 1>, scalar_prefetch = 0 : i64, scratch_operands = 0 : i64, tpu.core_type = #tpu.core_type<tc>, window_params = [{pipeline_mode = #tpu.pipeline_mode<synchronous>, transform_indices = @transform_0, window_bounds = array<i64: 2, 32>}, {pipeline_mode = #tpu.pipeline_mode<synchronous>, transform_indices = @transform_1, window_bounds = array<i64: 32, 64>}, {pipeline_mode = #tpu.pipeline_mode<synchronous>, transform_indices = @transform_2, window_bounds = array<i64: 1, 64>}, {pipeline_mode = #tpu.pipeline_mode<synchronous>, transform_indices = @transform_3, window_bounds = array<i64: 64, 64>}, {pipeline_mode = #tpu.pipeline_mode<synchronous>, transform_indices = @transform_4, window_bounds = array<i64: 1, 64>}, {pipeline_mode = #tpu.pipeline_mode<synchronous>, transform_indices = @transform_5, window_bounds = array<i64: 2, 64>}]} {
    %c0 = arith.constant 0 : index
    %c0_0 = arith.constant 0 : index
    %0 = vector.load %arg1[%c0, %c0_0] : memref<2x32xbf16, #tpu.memory_space<vmem>>, vector<2x32xbf16>
    %c0_1 = arith.constant 0 : index
    %c0_2 = arith.constant 0 : index
    %1 = vector.load %arg2[%c0_1, %c0_2] : memref<32x64xbf16, #tpu.memory_space<vmem>>, vector<32x64xbf16>
    %cst = arith.constant dense<0.000000e+00> : vector<2x64xf32>
    %2 = tpu.matmul %0, %1, %cst {dimension_numbers = #tpu.dot_dimension_numbers<[1], [0], [0], [1], [0, 0, 1, 1], [], []>} : vector<2x32xbf16>, vector<32x64xbf16>, vector<2x64xf32> -> vector<2x64xf32>
    %c0_3 = arith.constant 0 : index
    %c0_4 = arith.constant 0 : index
    %3 = vector.load %arg3[%c0_3, %c0_4] : memref<1x64xf32, #tpu.memory_space<vmem>>, vector<1x64xf32>
    %4 = vector.broadcast %3 : vector<1x64xf32> to vector<2x64xf32>
    %5 = arith.addf %2, %4 : vector<2x64xf32>
    %6 = arith.negf %5 : vector<2x64xf32>
    %7 = math.exp %6 : vector<2x64xf32>
    %cst_5 = arith.constant 1.000000e+00 : f32
    %8 = vector.broadcast %cst_5 : f32 to vector<2x64xf32>
    %9 = arith.addf %8, %7 : vector<2x64xf32>
    %10 = arith.divf %8, %9 : vector<2x64xf32>
    %11 = arith.mulf %5, %10 : vector<2x64xf32>
    %12 = arith.truncf %11 : vector<2x64xf32> to vector<2x64xbf16>
    %c0_6 = arith.constant 0 : index
    %c0_7 = arith.constant 0 : index
    %13 = vector.load %arg4[%c0_6, %c0_7] : memref<64x64xbf16, #tpu.memory_space<vmem>>, vector<64x64xbf16>
    %cst_8 = arith.constant dense<0.000000e+00> : vector<2x64xf32>
    %14 = tpu.matmul %12, %13, %cst_8 {dimension_numbers = #tpu.dot_dimension_numbers<[1], [0], [0], [1], [0, 0, 1, 1], [], []>} : vector<2x64xbf16>, vector<64x64xbf16>, vector<2x64xf32> -> vector<2x64xf32>
    %c0_9 = arith.constant 0 : index
    %c0_10 = arith.constant 0 : index
    %15 = vector.load %arg5[%c0_9, %c0_10] : memref<1x64xf32, #tpu.memory_space<vmem>>, vector<1x64xf32>
    %16 = vector.broadcast %15 : vector<1x64xf32> to vector<2x64xf32>
    %17 = arith.addf %14, %16 : vector<2x64xf32>
    %c0_11 = arith.constant 0 : index
    %c0_12 = arith.constant 0 : index
    %18 = vector.load %arg6[%c0_11, %c0_12] : memref<2x64xf32, #tpu.memory_space<vmem>>, vector<2x64xf32>
    tpu.vector_store %arg6[%c0_11, %c0_12], %17 {strides = array<i32>} : memref<2x64xf32, #tpu.memory_space<vmem>>, vector<2x64xf32>,
    return
  }
  func.func @transform_0(%arg0: i32) -> (i32, i32) {
    %c0_i32 = arith.constant 0 : i32
    %c0_i32_0 = arith.constant 0 : i32
    %c0_i32_1 = arith.constant 0 : i32
    return %c0_i32, %c0_i32_0 : i32, i32
  }
  func.func @transform_1(%arg0: i32) -> (i32, i32) {
    %c0_i32 = arith.constant 0 : i32
    %c0_i32_0 = arith.constant 0 : i32
    %c0_i32_1 = arith.constant 0 : i32
    return %c0_i32, %c0_i32_0 : i32, i32
  }
  func.func @transform_2(%arg0: i32) -> (i32, i32) {
    %c0_i32 = arith.constant 0 : i32
    %c0_i32_0 = arith.constant 0 : i32
    %c0_i32_1 = arith.constant 0 : i32
    return %c0_i32, %c0_i32_0 : i32, i32
  }
  func.func @transform_3(%arg0: i32) -> (i32, i32) {
    %c0_i32 = arith.constant 0 : i32
    %c0_i32_0 = arith.constant 0 : i32
    %c0_i32_1 = arith.constant 0 : i32
    return %c0_i32, %c0_i32_0 : i32, i32
  }
  func.func @transform_4(%arg0: i32) -> (i32, i32) {
    %c0_i32 = arith.constant 0 : i32
    %c0_i32_0 = arith.constant 0 : i32
    %c0_i32_1 = arith.constant 0 : i32
    return %c0_i32, %c0_i32_0 : i32, i32
  }
  func.func @transform_5(%arg0: i32) -> (i32, i32) {
    %c0_i32 = arith.constant 0 : i32
    %c0_i32_0 = arith.constant 0 : i32
    %c0_i32_1 = arith.constant 0 : i32
    return %c0_i32, %c0_i32_0 : i32, i32
  }
}

</mosaic_0001>

<llo_original>
// kernel: tpu_custom_call.1
$region0: #{tpu_custom_call.1}
  #allocation0 [shape = 'u32[]', space=smem, size = 0x4, offset = 0x4, fixed_abs, tag = 'smem constant byte address 0x4 - core index']
  #allocation1 [shape = 'u32[144,128]{1,0:T(1,128)}', space=vmem, size = 0x12000, scoped, tag = 'internal scratch']
  %s0 = inlined_call_operand.hbm [shape: bf16[2,32], index: 0, kind: input, shape index: {}]
  %s1 = inlined_call_operand.hbm [shape: bf16[32,64], index: 1, kind: input, shape index: {}]
  %s2 = inlined_call_operand.vmem [shape: f32[1,64], index: 2, kind: input, shape index: {}]
  %s3 = inlined_call_operand.hbm [shape: bf16[64,64], index: 3, kind: input, shape index: {}]
  %s4 = inlined_call_operand.vmem [shape: f32[1,64], index: 4, kind: input, shape index: {}]
  %s5 = inlined_call_operand.hbm [shape: f32[2,64], index: 5, kind: output, shape index: {}]
  %s6 = sld [smem:[#allocation0]]
  $region42: #{tpu_custom_call.1} parent=0
    _
  %s8 = ssub.s32 1, %s6
  %s9 = scalar_select 0, %s8, %s6
  $region1: #{tpu_custom_call.1} parent=0
    #allocation2 [shape = 'u8[512]{0}', space=vmem, size = 0x400, scoped, tag = 'input window, operand 0, single buffered']
    #allocation3 [shape = 's32[1]{0}', space=sflag, size = 0x4, scoped, tag = 'scoped memory for tpu_custom_call.1']
    #allocation4 [shape = 's32[1]{0}', space=sflag, size = 0x4, scoped, tag = 'scoped memory for tpu_custom_call.1']
    #allocation5 [shape = 'u8[8192]{0}', space=vmem, size = 0x2000, scoped, tag = 'input window, operand 1, single buffered']
    #allocation6 [shape = 's32[1]{0}', space=sflag, size = 0x4, scoped, tag = 'scoped memory for tpu_custom_call.1']
    #allocation7 [shape = 'u8[16384]{0}', space=vmem, size = 0x4000, scoped, tag = 'input window, operand 3, single buffered']
    #allocation8 [shape = 'u8[1024]{0}', space=vmem, size = 0x400, scoped, tag = 'output window, operand 0, single buffered']
    %10 = vsyncpa [#allocation3], 0
    %11 = vsyncpa [#allocation6], 0
    %12 = vsyncpa [#allocation4], 0
    // Predicated region
    $region2: #{tpu_custom_call.1} parent=1 // pred_check
      _
    $region3: #{tpu_custom_call.1} parent=1 // pred_check_branch
      %14 = sbr.rel (0) target = $region5
    $region4: #{tpu_custom_call.1} parent=1 // pred_region
      %s16 = ssub.s32 16, 16
      %17 = vsyncadd [#allocation3], %s16
      %s19 = sshll.u32 [#allocation2], 4
      %s20 = int_to_ptr.vmem [resolvable:$true] %s19
      %22 = dma.hbm_to_vmem [thread:$0]  %s0, 16, %s20, [#allocation3]
    $region5: #{tpu_custom_call.1} parent=1 // pred_fallthru
      _
    // Predicated region
    $region6: #{tpu_custom_call.1} parent=1 // pred_check
      _
    $region7: #{tpu_custom_call.1} parent=1 // pred_check_branch
      %24 = sbr.rel (0) target = $region9
    $region8: #{tpu_custom_call.1} parent=1 // pred_region
      %s26 = ssub.s32 256, 256
      %27 = vsyncadd [#allocation6], %s26
      %s28 = sshll.u32 [#allocation5], 4
      %s29 = int_to_ptr.vmem [resolvable:$true] %s28
      %34 = dma.hbm_to_vmem [thread:$0]  %s1, 256, %s29, [#allocation6], 64, 64, 4
    $region9: #{tpu_custom_call.1} parent=1 // pred_fallthru
      _
    // Predicated region
    $region10: #{tpu_custom_call.1} parent=1 // pred_check
      _
    $region11: #{tpu_custom_call.1} parent=1 // pred_check_branch
      %36 = sbr.rel (0) target = $region13
    $region12: #{tpu_custom_call.1} parent=1 // pred_region
      _
    $region13: #{tpu_custom_call.1} parent=1 // pred_fallthru
      _
    // Predicated region
    $region14: #{tpu_custom_call.1} parent=1 // pred_check
      _
    $region15: #{tpu_custom_call.1} parent=1 // pred_check_branch
      %38 = sbr.rel (0) target = $region17
    $region16: #{tpu_custom_call.1} parent=1 // pred_region
      %s40 = ssub.s32 512, 512
      %41 = vsyncadd [#allocation6], %s40
      %s42 = sshll.u32 [#allocation7], 4
      %s43 = int_to_ptr.vmem [resolvable:$true] %s42
      %48 = dma.hbm_to_vmem [thread:$0]  %s3, 512, %s43, [#allocation6], 64, 64, 4
    $region17: #{tpu_custom_call.1} parent=1 // pred_fallthru
      _
    // Predicated region
    $region18: #{tpu_custom_call.1} parent=1 // pred_check
      _
    $region19: #{tpu_custom_call.1} parent=1 // pred_check_branch
      %50 = sbr.rel (0) target = $region21
    $region20: #{tpu_custom_call.1} parent=1 // pred_region
      _
    $region21: #{tpu_custom_call.1} parent=1 // pred_fallthru
      _
    // Predicated region
    $region22: #{tpu_custom_call.1} parent=1 // pred_check
      _
    $region23: #{tpu_custom_call.1} parent=1 // pred_check_branch
      %52 = sbr.rel (0) target = $region25
    $region24: #{tpu_custom_call.1} parent=1 // pred_region
      %53 = dma.done [#allocation3], 16
    $region25: #{tpu_custom_call.1} parent=1 // pred_fallthru
      _
    // Predicated region
    $region26: #{tpu_custom_call.1} parent=1 // pred_check
      _
    $region27: #{tpu_custom_call.1} parent=1 // pred_check_branch
      %55 = sbr.rel (0) target = $region29
    $region28: #{tpu_custom_call.1} parent=1 // pred_region
      %56 = dma.done [#allocation6], 256
    $region29: #{tpu_custom_call.1} parent=1 // pred_fallthru
      _
    // Predicated region
    $region30: #{tpu_custom_call.1} parent=1 // pred_check
      _
    $region31: #{tpu_custom_call.1} parent=1 // pred_check_branch
      %58 = sbr.rel (0) target = $region33
    $region32: #{tpu_custom_call.1} parent=1 // pred_region
      %59 = dma.done [#allocation6], 512
    $region33: #{tpu_custom_call.1} parent=1 // pred_fallthru
      _
    %v61 = vld [vmem:[#allocation2] sm:$0x1]
    %v62 = vld [vmem:[#allocation5] sm:$0xf]
    %v63 = vld [vmem:[#allocation5 + $0x4] sm:$0xf]
    %v64 = vld [vmem:[#allocation5 + $0x8] sm:$0xf]
    %v65 = vld [vmem:[#allocation5 + $0xc] sm:$0xf]
    %v66 = vld [vmem:[%s2] sm:$0x1]
    %v68 = vlaneseq
    %v69 = vshrl.u32 %v68, 7
    %v70 = vsub.s32 0, %v69
    %v71 = vrot.slane %v66, %v70
    %v77 = vunpack.c.l.b16 %v62
    %v78 = vunpack.c.l.b16 %v63
    %v79 = vunpack.c.l.b16 %v64
    %v80 = vunpack.c.l.b16 %v65
    %v81 = vpack.c.b16 %v78, %v77
    %v82 = vpack.c.b16 %v80, %v79
    %vm85 = vcmask 261120
    %v87 = vsel %vm85, %v61, 0
    %89 = vmatprep.subr.bf16.mxu0 0
    %90 = vmatpush1.bf16.msra.mxu0 %v81
    %91 = vmatprep.subr.bf16.mxu0 0
    %92 = vmatpush1.bf16.msra.mxu0 %v82
    %93 = vmatprep.subr.bf16.mxu0 0
    %94 = vmatpush1.bf16.msra.mxu0 0
    %95 = vmatprep.subr.bf16.mxu0 0
    %96 = vmatpush1.bf16.msra.mxu0 0
    %97 = vmatprep.subr.bf16.mxu0 0
    %98 = vmatpush1.bf16.msra.mxu0 0
    %99 = vmatprep.subr.bf16.mxu0 0
    %100 = vmatpush1.bf16.msra.mxu0 0
    %101 = vmatprep.subr.bf16.mxu0 0
    %102 = vmatpush1.bf16.msra.mxu0 0
    %103 = vmatprep.subr.bf16.mxu0 0
    %104 = vmatpush1.bf16.msra.mxu0 0
    %105 = vmatprep.subr.bf16.mxu0 0
    %106 = vmatpush1.bf16.msra.mxu0 0
    %107 = vmatprep.subr.bf16.mxu0 0
    %108 = vmatpush1.bf16.msra.mxu0 0
    %109 = vmatprep.subr.bf16.mxu0 0
    %110 = vmatpush1.bf16.msra.mxu0 0
    %111 = vmatprep.subr.bf16.mxu0 0
    %112 = vmatpush1.bf16.msra.mxu0 0
    %113 = vmatprep.subr.bf16.mxu0 0
    %114 = vmatpush1.bf16.msra.mxu0 0
    %115 = vmatprep.subr.bf16.mxu0 0
    %116 = vmatpush1.bf16.msra.mxu0 0
    %117 = vmatprep.subr.bf16.mxu0 0
    %118 = vmatpush1.bf16.msra.mxu0 0
    %119 = vmatprep.subr.bf16.mxu0 0
    %120 = vmatpush1.bf16.msra.mxu0 0
    %121 = vmatprep.mubr.bf16.mxu0 0
    %122 = vmatmul.mubr.bf16.gmra.mrb[0].mxu0 %v87
    %v123 = vpop.f32.mrb[0].mxu0
    %v124 = vadd.f32 %v71, %v123
    %v125 = vpop.f32.mrb[0].mxu0
    %v126 = vpop.f32.mrb[0].mxu0
    %v127 = vpop.f32.mrb[0].mxu0
    %128 = vdwg.mxu0
    %v129 = vxor.u32 %v124, 2147483648
    %v130 = vmul.f32 %v129, 1.442695
    %v131 = vpow.pop %v130
    %v132 = vadd.f32 %v131, 1.0
    %v133 = vrcp.pop %v132
    %v134 = vmul.f32 1.0, %v133
    %v135 = vmul.f32 %v124, %v134
    %v136 = vpack.c.bf16 %v135, %v135
    %v137 = vld [vmem:[#allocation7] sm:$0xf]
    %v138 = vld [vmem:[#allocation7 + $0x4] sm:$0xf]
    %v139 = vld [vmem:[#allocation7 + $0x8] sm:$0xf]
    %v140 = vld [vmem:[#allocation7 + $0xc] sm:$0xf]
    %v141 = vld [vmem:[#allocation7 + $0x10] sm:$0xf]
    %v142 = vld [vmem:[#allocation7 + $0x14] sm:$0xf]
    %v143 = vld [vmem:[#allocation7 + $0x18] sm:$0xf]
    %v144 = vld [vmem:[#allocation7 + $0x1c] sm:$0xf]
    %v145 = vld [vmem:[%s4] sm:$0x1]
    %v147 = vlaneseq
    %v148 = vshrl.u32 %v147, 7
    %v149 = vsub.s32 0, %v148
    %v150 = vrot.slane %v145, %v149
    %v160 = vunpack.c.l.b16 %v137
    %v161 = vunpack.c.l.b16 %v138
    %v162 = vunpack.c.l.b16 %v139
    %v163 = vunpack.c.l.b16 %v140
    %v164 = vunpack.c.l.b16 %v141
    %v165 = vunpack.c.l.b16 %v142
    %v166 = vunpack.c.l.b16 %v143
    %v167 = vunpack.c.l.b16 %v144
    %v168 = vpack.c.b16 %v161, %v160
    %v169 = vpack.c.b16 %v163, %v162
    %v170 = vpack.c.b16 %v165, %v164
    %v171 = vpack.c.b16 %v167, %v166
    %vm176 = vcmask 523264
    %v178 = vsel %vm176, %v136, 0
    %180 = vmatprep.subr.bf16.mxu0 0
    %181 = vmatpush1.bf16.msra.mxu0 %v168
    %182 = vmatprep.subr.bf16.mxu0 0
    %183 = vmatpush1.bf16.msra.mxu0 %v169
    %184 = vmatprep.subr.bf16.mxu0 0
    %185 = vmatpush1.bf16.msra.mxu0 %v170
    %186 = vmatprep.subr.bf16.mxu0 0
    %187 = vmatpush1.bf16.msra.mxu0 %v171
    %188 = vmatprep.subr.bf16.mxu0 0
    %189 = vmatpush1.bf16.msra.mxu0 0
    %190 = vmatprep.subr.bf16.mxu0 0
    %191 = vmatpush1.bf16.msra.mxu0 0
    %192 = vmatprep.subr.bf16.mxu0 0
    %193 = vmatpush1.bf16.msra.mxu0 0
    %194 = vmatprep.subr.bf16.mxu0 0
    %195 = vmatpush1.bf16.msra.mxu0 0
    %196 = vmatprep.subr.bf16.mxu0 0
    %197 = vmatpush1.bf16.msra.mxu0 0
    %198 = vmatprep.subr.bf16.mxu0 0
    %199 = vmatpush1.bf16.msra.mxu0 0
    %200 = vmatprep.subr.bf16.mxu0 0
    %201 = vmatpush1.bf16.msra.mxu0 0
    %202 = vmatprep.subr.bf16.mxu0 0
    %203 = vmatpush1.bf16.msra.mxu0 0
    %204 = vmatprep.subr.bf16.mxu0 0
    %205 = vmatpush1.bf16.msra.mxu0 0
    %206 = vmatprep.subr.bf16.mxu0 0
    %207 = vmatpush1.bf16.msra.mxu0 0
    %208 = vmatprep.subr.bf16.mxu0 0
    %209 = vmatpush1.bf16.msra.mxu0 0
    %210 = vmatprep.subr.bf16.mxu0 0
    %211 = vmatpush1.bf16.msra.mxu0 0
    %212 = vmatprep.mubr.bf16.mxu0 0
    %213 = vmatmul.mubr.bf16.gmra.mrb[0].mxu0 %v178
    %v214 = vpop.f32.mrb[0].mxu0
    %v215 = vadd.f32 %v150, %v214
    %v216 = vpop.f32.mrb[0].mxu0
    %v217 = vpop.f32.mrb[0].mxu0
    %v218 = vpop.f32.mrb[0].mxu0
    %219 = vdwg.mxu0
    %vm220 = vcmask 517120
    %221 = vst.msk [vmem:[#allocation8] sm:$0x3] %vm220, %v215
    // Predicated region
    $region34: #{tpu_custom_call.1} parent=1 // pred_check
      _
    $region35: #{tpu_custom_call.1} parent=1 // pred_check_branch
      %223 = sbr.rel (0) target = $region37
    $region36: #{tpu_custom_call.1} parent=1 // pred_region
      %s225 = ssub.s32 32, 32
      %226 = vsyncadd [#allocation4], %s225
      %s228 = sshll.u32 [#allocation8], 4
      %s229 = int_to_ptr.vmem [resolvable:$true] %s228
      %231 = dma.vmem_to_hbm [thread:$0]  %s229, 32, %s5, [#allocation4]
    $region37: #{tpu_custom_call.1} parent=1 // pred_fallthru
      _
    // Predicated region
    $region38: #{tpu_custom_call.1} parent=1 // pred_check
      _
    $region39: #{tpu_custom_call.1} parent=1 // pred_check_branch
      %233 = sbr.rel (0) target = $region41
    $region40: #{tpu_custom_call.1} parent=1 // pred_region
      %234 = dma.done [#allocation4], 32
    $region41: #{tpu_custom_call.1} parent=1 // pred_fallthru
      _
    %235 = vsyncpa [#allocation3], 1
    %236 = vsyncpa [#allocation6], 1
    %237 = vsyncpa [#allocation4], 1

</llo_original>
